<compile_context>
chip_gen: v5e
topology: v5e:2x2
jax: 0.10.0
libtpu: 0.0.40
codegen_flags: <defaults>
</compile_context>

<pallas_src>
import functools

import jax
import jax.numpy as jnp
from jax import lax
from jax.experimental import pallas as pl
from jax.experimental.pallas import tpu as pltpu


def _round_up(x, m):
    return (x + m - 1) // m * m


def _conv_stats_kernel(patches_ref, w_ref, b_ref, y_ref, stats_ref, *, m_total, tm):
    """Pass 1: bf16 MXU matmul (f32 acc) + bias + LeakyReLU + stat accumulation."""
    i = pl.program_id(0)

    @pl.when(i == 0)
    def _init():
        stats_ref[...] = jnp.zeros_like(stats_ref)

    x = patches_ref[...]                                   # [TM, KKC] bf16
    w = w_ref[...]                                         # [KKC, CP] bf16
    y = jnp.dot(x, w, preferred_element_type=jnp.float32) + b_ref[...]   # [TM, CP] f32
    y = jnp.where(y >= 0.0, y, 0.01 * y)                   # LeakyReLU (slope 0.01)

    # Single-pass sum / sum-of-squares per channel, masked against the rows
    # that only exist because M was padded up to a multiple of TM.
    row = lax.broadcasted_iota(jnp.int32, (tm, 1), 0) + i * tm
    valid = (row < m_total).astype(jnp.float32)            # [TM, 1]
    ym = y * valid
    stats_ref[0:1, :] += jnp.sum(ym, axis=0, keepdims=True)
    stats_ref[1:2, :] += jnp.sum(ym * ym, axis=0, keepdims=True)

    # Lane-dense store: channels -> sublanes, positions -> lanes (XLU transpose
    # avoids narrow masked stores with Cout << 128 and avoids padding the HBM
    # intermediate out to 128 lanes).
    c8 = y_ref.shape[0]
    y_ref[...] = y.T[0:c8, :]


def _bn_normalize_kernel(y_ref, scale_ref, shift_ref, out_ref):
    """Pass 2: apply global batch statistics: out = y * scale + shift."""
    out_ref[...] = y_ref[...] * scale_ref[...] + shift_ref[...]


def conv_block_forward(x_nchw, weight, bias, gamma, beta, *, stride, padding, tm=256):
    """ConvBlock forward. x_nchw: [N, Cin, H, W]; weight: [Cout, Cin, KH, KW]."""
    N, Cin, H, W = x_nchw.shape
    Cout, _, KH, KW = weight.shape
    OH = (H + 2 * padding - KH) // stride + 1
    OW = (W + 2 * padding - KW) // stride + 1
    M = N * OH * OW
    KKC = KH * KW * Cin

    CP = _round_up(Cout, 128)                 # lane-padded channel dim fed to the MXU
    C8 = _round_up(Cout, 8)                   # sublane-padded channel dim of channel-major outs
    TM = min(tm, _round_up(M, 128))           # M tile; multiple of 128 -> lane-dense stores
    Mp = _round_up(M, TM)
    grid_m = Mp // TM

    # --- glue: im2col into a [Mp, KKC] bf16 matrix (not the hot path) ---
    xp = jnp.pad(x_nchw.astype(jnp.bfloat16),
                 ((0, 0), (0, 0), (padding, padding), (padding, padding)))
    x_nhwc = jnp.transpose(xp, (0, 2, 3, 1))                       # [N, Hp, Wp, Cin]
    slabs = []
    for kh in range(KH):
        for kw in range(KW):
            slabs.append(
                x_nhwc[:, kh:kh + stride * OH:stride, kw:kw + stride * OW:stride, :])
    patches = jnp.stack(slabs, axis=3).reshape(M, KKC)             # [M, KH*KW*Cin] bf16
    patches = jnp.pad(patches, ((0, Mp - M), (0, 0)))

    # [Cout, Cin, KH, KW] -> [KH*KW*Cin, Cout] (bf16), lanes zero-padded to CP.
    w_mat = jnp.transpose(weight, (2, 3, 1, 0)).reshape(KKC, Cout).astype(jnp.bfloat16)
    w_mat = jnp.pad(w_mat, ((0, 0), (0, CP - Cout)))
    b_row = jnp.pad(bias.astype(jnp.float32).reshape(1, Cout), ((0, 0), (0, CP - Cout)))

    # --- pass 1: conv + bias + LeakyReLU + per-channel sum/sumsq accumulation ---
    y_cm, stats = pl.pallas_call(
        functools.partial(_conv_stats_kernel, m_total=M, tm=TM),
        out_shape=(jax.ShapeDtypeStruct((C8, Mp), jnp.float32),
                   jax.ShapeDtypeStruct((8, CP), jnp.float32)),
        grid=(grid_m,),
        in_specs=[
            pl.BlockSpec((TM, KKC), lambda i: (i, 0)),
            pl.BlockSpec((KKC, CP), lambda i: (0, 0)),
            pl.BlockSpec((1, CP), lambda i: (0, 0)),
        ],
        out_specs=(
            pl.BlockSpec((C8, TM), lambda i: (0, i)),
            pl.BlockSpec((8, CP), lambda i: (0, 0)),      # resident stats accumulator
        ),
        compiler_params=pltpu.CompilerParams(
            dimension_semantics=("arbitrary",),            # sequential: stats accumulate
            vmem_limit_bytes=32 * 1024 * 1024),            # sized for v7x's smaller VMEM
    )(patches, w_mat, b_row)

    # --- tiny per-channel finalize (Cout scalars): mean/var -> scale/shift ---
    mean = stats[0, :Cout] / M
    var = stats[1, :Cout] / M - mean * mean                # biased variance (training BN)
    inv_std = lax.rsqrt(var + 1e-5)
    scale = gamma.astype(jnp.float32) * inv_std
    shift = beta.astype(jnp.float32) - mean * scale
    scale_col = jnp.zeros((C8, 1), jnp.float32).at[:Cout, 0].set(scale)
    shift_col = jnp.zeros((C8, 1), jnp.float32).at[:Cout, 0].set(shift)

    # --- pass 2: normalize (parallel over M tiles -> both TCs on v7x) ---
    out_cm = pl.pallas_call(
        _bn_normalize_kernel,
        out_shape=jax.ShapeDtypeStruct((C8, Mp), jnp.float32),
        grid=(grid_m,),
        in_specs=[
            pl.BlockSpec((C8, TM), lambda i: (0, i)),
            pl.BlockSpec((C8, 1), lambda i: (0, 0)),
            pl.BlockSpec((C8, 1), lambda i: (0, 0)),
        ],
        out_specs=pl.BlockSpec((C8, TM), lambda i: (0, i)),
        compiler_params=pltpu.CompilerParams(
            dimension_semantics=("parallel",),
            vmem_limit_bytes=32 * 1024 * 1024),
    )(y_cm, scale_col, shift_col)

    # channel-major [Cout, N*OH*OW] -> NCHW
    out = out_cm[:Cout, :M].reshape(Cout, N, OH, OW)
    return jnp.transpose(out, (1, 0, 2, 3))


def _reference(x_nchw, weight, bias, gamma, beta, *, stride, padding):
    """Pure-JAX reference matching PyTorch ConvBlock forward (training mode).

    Inputs are rounded to bf16 (as the kernel's MXU operands are) so the
    comparison isolates genuine kernel errors rather than bf16 quantization."""
    xq = x_nchw.astype(jnp.bfloat16).astype(jnp.float32)
    wq = weight.astype(jnp.bfloat16).astype(jnp.float32)
    y = lax.conv_general_dilated(
        xq, wq, window_strides=(stride, stride),
        padding=[(padding, padding), (padding, padding)],
        dimension_numbers=("NCHW", "OIHW", "NCHW"),
        precision=lax.Precision.HIGHEST)
    y = y + bias.reshape(1, -1, 1, 1)
    y = jnp.where(y >= 0, y, 0.01 * y)                     # LeakyReLU
    mean = jnp.mean(y, axis=(0, 2, 3), keepdims=True)
    var = jnp.mean((y - mean) ** 2, axis=(0, 2, 3), keepdims=True)
    y = (y - mean) * lax.rsqrt(var + 1e-5)
    return y * gamma.reshape(1, -1, 1, 1) + beta.reshape(1, -1, 1, 1)


if __name__ == "__main__":
    # ConvBlock(in_channels=4, out_channels=8, kernel_size=3, stride=1, padding=1)
    N, Cin, H, W = 2, 4, 16, 16
    Cout, K, stride, padding = 8, 3, 1, 1

    key = jax.random.PRNGKey(0)
    kx, kw, kb = jax.random.split(key, 3)

    x = jax.random.normal(kx, (N, Cin, H, W), dtype=jnp.float32)
    conv_w = jax.random.normal(kw, (Cout, Cin, K, K), dtype=jnp.float32) * 0.1
    conv_b = jax.random.normal(kb, (Cout,), dtype=jnp.float32) * 0.1
    bn_gamma = jnp.ones((Cout,), dtype=jnp.float32)        # PyTorch BatchNorm2d init
    bn_beta = jnp.zeros((Cout,), dtype=jnp.float32)

    fwd = functools.partial(conv_block_forward, stride=stride, padding=padding)
    out = jax.block_until_ready(
        jax.jit(fwd)(x, conv_w, conv_b, bn_gamma, bn_beta))

    ref = _reference(x, conv_w, conv_b, bn_gamma, bn_beta,
                     stride=stride, padding=padding)
    assert out.shape == (N, Cout, H, W), out.shape
    err = float(jnp.max(jnp.abs(out - ref)))
    assert jnp.allclose(out, ref, rtol=2e-3, atol=2e-3), err

    print("KERNEL_OK")
</pallas_src>

<mosaic_0001>
module attributes {stable_mosaic.version = 11 : i64} {
  func.func @_conv_stats_kernel(%arg0: i32, %arg1: memref<256x36xbf16, #tpu.memory_space<vmem>>, %arg2: memref<36x128xbf16, #tpu.memory_space<vmem>>, %arg3: memref<1x128xf32, #tpu.memory_space<vmem>>, %arg4: memref<8x256xf32, #tpu.memory_space<vmem>>, %arg5: memref<8x128xf32, #tpu.memory_space<vmem>>) attributes {dimension_semantics = [#tpu.dimension_semantics<arbitrary>], iteration_bounds = array<i64: 2>, scalar_prefetch = 0 : i64, scratch_operands = 0 : i64, tpu.core_type = #tpu.core_type<tc>, window_params = [{transform_indices = @transform_0, window_bounds = array<i64: 256, 36>}, {pipeline_mode = #tpu.pipeline_mode<synchronous>, transform_indices = @transform_1, window_bounds = array<i64: 36, 128>}, {pipeline_mode = #tpu.pipeline_mode<synchronous>, transform_indices = @transform_2, window_bounds = array<i64: 1, 128>}, {transform_indices = @transform_3, window_bounds = array<i64: 8, 256>}, {pipeline_mode = #tpu.pipeline_mode<synchronous>, transform_indices = @transform_4, window_bounds = array<i64: 8, 128>}]} {
    %c0_i32 = arith.constant 0 : i32
    %0 = arith.cmpi eq, %arg0, %c0_i32 : i32
    %1 = arith.extui %0 : i1 to i32
    %c0_i32_0 = arith.constant 0 : i32
    %2 = arith.cmpi ne, %1, %c0_i32_0 : i32
    scf.if %2 {
      %cst_19 = arith.constant 0.000000e+00 : f32
      %38 = vector.broadcast %cst_19 : f32 to vector<8x128xf32>
      %c0_20 = arith.constant 0 : index
      %c0_21 = arith.constant 0 : index
      %39 = vector.load %arg5[%c0_20, %c0_21] : memref<8x128xf32, #tpu.memory_space<vmem>>, vector<8x128xf32>
      tpu.vector_store %arg5[%c0_20, %c0_21], %38 {strides = array<i32>} : memref<8x128xf32, #tpu.memory_space<vmem>>, vector<8x128xf32>,
    } else {
    }
    %c0 = arith.constant 0 : index
    %c0_1 = arith.constant 0 : index
    %3 = vector.load %arg1[%c0, %c0_1] : memref<256x36xbf16, #tpu.memory_space<vmem>>, vector<256x36xbf16>
    %c0_2 = arith.constant 0 : index
    %c0_3 = arith.constant 0 : index
    %4 = vector.load %arg2[%c0_2, %c0_3] : memref<36x128xbf16, #tpu.memory_space<vmem>>, vector<36x128xbf16>
    %cst = arith.constant dense<0.000000e+00> : vector<256x128xf32>
    %5 = tpu.matmul %3, %4, %cst {dimension_numbers = #tpu.dot_dimension_numbers<[1], [0], [0], [1], [0, 0, 1, 1], [], []>} : vector<256x36xbf16>, vector<36x128xbf16>, vector<256x128xf32> -> vector<256x128xf32>
    %c0_4 = arith.constant 0 : index
    %c0_5 = arith.constant 0 : index
    %6 = vector.load %arg3[%c0_4, %c0_5] : memref<1x128xf32, #tpu.memory_space<vmem>>, vector<1x128xf32>
    %7 = vector.broadcast %6 : vector<1x128xf32> to vector<256x128xf32>
    %8 = arith.addf %5, %7 : vector<256x128xf32>
    %cst_6 = arith.constant 0.000000e+00 : f32
    %9 = vector.broadcast %cst_6 : f32 to vector<256x128xf32>
    %10 = arith.cmpf oge, %8, %9 : vector<256x128xf32>
    %cst_7 = arith.constant 0.00999999977 : f32
    %11 = vector.broadcast %cst_7 : f32 to vector<256x128xf32>
    %12 = arith.mulf %11, %8 : vector<256x128xf32>
    %13 = arith.select %10, %8, %12 : vector<256x128xi1>, vector<256x128xf32>
    %14 = tpu.iota {dimensions = array<i32: 0>} : vector<256x1xi32>
    %c256_i32 = arith.constant 256 : i32
    %15 = arith.muli %arg0, %c256_i32 : i32
    %16 = vector.broadcast %15 : i32 to vector<256x1xi32>
    %17 = arith.addi %14, %16 : vector<256x1xi32>
    %c512_i32 = arith.constant 512 : i32
    %18 = vector.broadcast %c512_i32 : i32 to vector<256x1xi32>
    %19 = arith.cmpi slt, %17, %18 : vector<256x1xi32>
    %20 = arith.extui %19 : vector<256x1xi1> to vector<256x1xi32>
    %21 = arith.sitofp %20 : vector<256x1xi32> to vector<256x1xf32>
    %22 = vector.broadcast %21 : vector<256x1xf32> to vector<256x128xf32>
    %23 = arith.mulf %13, %22 : vector<256x128xf32>
    %c0_8 = arith.constant 0 : index
    %c0_9 = arith.constant 0 : index
    %24 = vector.load %arg5[%c0_8, %c0_9] : memref<8x128xf32, #tpu.memory_space<vmem>>, vector<1x128xf32>
    %cst_10 = arith.constant dense<0.000000e+00> : vector<128xf32>
    %25 = vector.multi_reduction <add>, %23, %cst_10 [0] : vector<256x128xf32> to vector<128xf32>
    %26 = vector.shape_cast %25 : vector<128xf32> to vector<1x128xf32>
    %27 = arith.addf %24, %26 : vector<1x128xf32>
    %c0_11 = arith.constant 0 : index
    %c0_12 = arith.constant 0 : index
    %28 = vector.load %arg5[%c0_11, %c0_12] : memref<8x128xf32, #tpu.memory_space<vmem>>, vector<1x128xf32>
    tpu.vector_store %arg5[%c0_11, %c0_12], %27 {strides = array<i32>} : memref<8x128xf32, #tpu.memory_space<vmem>>, vector<1x128xf32>,
    %c1 = arith.constant 1 : index
    %c0_13 = arith.constant 0 : index
    %29 = vector.load %arg5[%c1, %c0_13] : memref<8x128xf32, #tpu.memory_space<vmem>>, vector<1x128xf32>
    %30 = arith.mulf %23, %23 : vector<256x128xf32>
    %cst_14 = arith.constant dense<0.000000e+00> : vector<128xf32>
    %31 = vector.multi_reduction <add>, %30, %cst_14 [0] : vector<256x128xf32> to vector<128xf32>
    %32 = vector.shape_cast %31 : vector<128xf32> to vector<1x128xf32>
    %33 = arith.addf %29, %32 : vector<1x128xf32>
    %c1_15 = arith.constant 1 : index
    %c0_16 = arith.constant 0 : index
    %34 = vector.load %arg5[%c1_15, %c0_16] : memref<8x128xf32, #tpu.memory_space<vmem>>, vector<1x128xf32>
    tpu.vector_store %arg5[%c1_15, %c0_16], %33 {strides = array<i32>} : memref<8x128xf32, #tpu.memory_space<vmem>>, vector<1x128xf32>,
    %35 = tpu.transpose %13, [1, 0] : vector<256x128xf32> -> vector<128x256xf32>
    %36 = vector.extract_strided_slice %35 {offsets = [0, 0], sizes = [8, 256], strides = [1, 1]} : vector<128x256xf32> to vector<8x256xf32>
    %c0_17 = arith.constant 0 : index
    %c0_18 = arith.constant 0 : index
    %37 = vector.load %arg4[%c0_17, %c0_18] : memref<8x256xf32, #tpu.memory_space<vmem>>, vector<8x256xf32>
    tpu.vector_store %arg4[%c0_17, %c0_18], %36 {strides = array<i32>} : memref<8x256xf32, #tpu.memory_space<vmem>>, vector<8x256xf32>,
    return
  }
  func.func @transform_0(%arg0: i32) -> (i32, i32) {
    %c0_i32 = arith.constant 0 : i32
    %c0_i32_0 = arith.constant 0 : i32
    return %arg0, %c0_i32 : i32, i32
  }
  func.func @transform_1(%arg0: i32) -> (i32, i32) {
    %c0_i32 = arith.constant 0 : i32
    %c0_i32_0 = arith.constant 0 : i32
    %c0_i32_1 = arith.constant 0 : i32
    return %c0_i32, %c0_i32_0 : i32, i32
  }
  func.func @transform_2(%arg0: i32) -> (i32, i32) {
    %c0_i32 = arith.constant 0 : i32
    %c0_i32_0 = arith.constant 0 : i32
    %c0_i32_1 = arith.constant 0 : i32
    return %c0_i32, %c0_i32_0 : i32, i32
  }
  func.func @transform_3(%arg0: i32) -> (i32, i32) {
    %c0_i32 = arith.constant 0 : i32
    %c0_i32_0 = arith.constant 0 : i32
    return %c0_i32, %arg0 : i32, i32
  }
  func.func @transform_4(%arg0: i32) -> (i32, i32) {
    %c0_i32 = arith.constant 0 : i32
    %c0_i32_0 = arith.constant 0 : i32
    %c0_i32_1 = arith.constant 0 : i32
    return %c0_i32, %c0_i32_0 : i32, i32
  }
}

module attributes {stable_mosaic.version = 11 : i64} {
  func.func @_bn_normalize_kernel(%arg0: i32, %arg1: memref<8x256xf32, #tpu.memory_space<vmem>>, %arg2: memref<8x1xf32, #tpu.memory_space<vmem>>, %arg3: memref<8x1xf32, #tpu.memory_space<vmem>>, %arg4: memref<8x256xf32, #tpu.memory_space<vmem>>) attributes {dimension_semantics = [#tpu.dimension_semantics<parallel>], iteration_bounds = array<i64: 2>, scalar_prefetch = 0 : i64, scratch_operands = 0 : i64, tpu.core_type = #tpu.core_type<tc>, window_params = [{transform_indices = @transform_0, window_bounds = array<i64: 8, 256>}, {pipeline_mode = #tpu.pipeline_mode<synchronous>, transform_indices = @transform_1, window_bounds = array<i64: 8, 1>}, {pipeline_mode = #tpu.pipeline_mode<synchronous>, transform_indices = @transform_2, window_bounds = array<i64: 8, 1>}, {transform_indices = @transform_3, window_bounds = array<i64: 8, 256>}]} {
    %c0 = arith.constant 0 : index
    %c0_0 = arith.constant 0 : index
    %0 = vector.load %arg1[%c0, %c0_0] : memref<8x256xf32, #tpu.memory_space<vmem>>, vector<8x256xf32>
    %c0_1 = arith.constant 0 : index
    %c0_2 = arith.constant 0 : index
    %1 = vector.load %arg2[%c0_1, %c0_2] : memref<8x1xf32, #tpu.memory_space<vmem>>, vector<8x1xf32>
    %2 = vector.broadcast %1 : vector<8x1xf32> to vector<8x256xf32>
    %3 = arith.mulf %0, %2 : vector<8x256xf32>
    %c0_3 = arith.constant 0 : index
    %c0_4 = arith.constant 0 : index
    %4 = vector.load %arg3[%c0_3, %c0_4] : memref<8x1xf32, #tpu.memory_space<vmem>>, vector<8x1xf32>
    %5 = vector.broadcast %4 : vector<8x1xf32> to vector<8x256xf32>
    %6 = arith.addf %3, %5 : vector<8x256xf32>
    %c0_5 = arith.constant 0 : index
    %c0_6 = arith.constant 0 : index
    %7 = vector.load %arg4[%c0_5, %c0_6] : memref<8x256xf32, #tpu.memory_space<vmem>>, vector<8x256xf32>
    tpu.vector_store %arg4[%c0_5, %c0_6], %6 {strides = array<i32>} : memref<8x256xf32, #tpu.memory_space<vmem>>, vector<8x256xf32>,
    return
  }
  func.func @transform_0(%arg0: i32) -> (i32, i32) {
    %c0_i32 = arith.constant 0 : i32
    %c0_i32_0 = arith.constant 0 : i32
    return %c0_i32, %arg0 : i32, i32
  }
  func.func @transform_1(%arg0: i32) -> (i32, i32) {
    %c0_i32 = arith.constant 0 : i32
    %c0_i32_0 = arith.constant 0 : i32
    %c0_i32_1 = arith.constant 0 : i32
    return %c0_i32, %c0_i32_0 : i32, i32
  }
  func.func @transform_2(%arg0: i32) -> (i32, i32) {
    %c0_i32 = arith.constant 0 : i32
    %c0_i32_0 = arith.constant 0 : i32
    %c0_i32_1 = arith.constant 0 : i32
    return %c0_i32, %c0_i32_0 : i32, i32
  }
  func.func @transform_3(%arg0: i32) -> (i32, i32) {
    %c0_i32 = arith.constant 0 : i32
    %c0_i32_0 = arith.constant 0 : i32
    return %c0_i32, %arg0 : i32, i32
  }
}

</mosaic_0001>

<llo_original>
// kernel: conv_block_forward.3
$region0: #{conv_block_forward.3}
  #allocation0 [shape = 'u32[]', space=smem, size = 0x4, offset = 0x4, fixed_abs, tag = 'smem constant byte address 0x4 - core index']
  #allocation1 [shape = 'u32[72,128]{1,0:T(1,128)}', space=vmem, size = 0x9000, scoped, tag = 'internal scratch']
  %s0 = inlined_call_operand.vmem [shape: f32[8,512], index: 0, kind: input, shape index: {}]
  %s1 = inlined_call_operand.vmem [shape: f32[8,1], index: 1, kind: input, shape index: {}]
  %s2 = inlined_call_operand.vmem [shape: f32[8,1], index: 2, kind: input, shape index: {}]
  %s3 = inlined_call_operand.vmem [shape: f32[8,512], index: 3, kind: output, shape index: {}]
  %s4 = sld [smem:[#allocation0]]
  $region45: #{conv_block_forward.3} parent=0
    _
  %s6 = ssub.s32 1, %s4
  %s7 = scalar_select 0, %s6, %s4
  loop: start=0, step=1, limit=4
  $region2: #{conv_block_forward.3} parent=0 // loop_pre_header
    _
  $region3: #{conv_block_forward.3} parent=0 // loop_header
    %s9 = sphi 0, %s13
    %p10 = scmp.ge.s32.totalorder %s9, 4
    %s19 = sphi 0, %s21
    %s22 = sphi 0, %s19
    %s23 = sphi 0, %s22
    %s39 = sphi 0, %s23
    %s43 = sphi 0, %s43
    %s45 = sphi 0, %s43
    %s46 = sphi 0, %s45
    %s60 = sphi 0, %s46
    %s64 = sphi 0, %s64
    %s66 = sphi 0, %s64
    %s67 = sphi 0, %s66
    %s81 = sphi 0, %s67
    %s87 = sphi 0, %s89
    %s90 = sphi 0, %s87
    %s91 = sphi 0, %s90
    %s107 = sphi 0, %s91
  $region4: #{conv_block_forward.3} parent=0 // loop_header_branch
    %12 = sbr.rel (%p10) target = $region8
  $region5: #{conv_block_forward.3} parent=0 // loop_body
    %s14 = ssub.s32 %s9, 1
    %s15 = ssub.s32 %s9, 2
    %s16 = sadd.s32 %s9, 1
    %s17 = ssub.s32 %s9, %s16
    %p18 = scmp.eq.s32.totalorder %s17, 0
    %s20 = sadd.s32 %s19, 1
    %s21 = scalar_select %p18, %s19, %s20
    %p24 = pneg %p18
    %p25 = scmp.eq.s32.totalorder %s9, 1
    %p26 = por %p24, %p25
    %p27 = scmp.ne.s32.totalorder %s19, %s22
    %p28 = scmp.eq.s32.totalorder %s9, 0
    %p29 = por %p27, %p28
    %p30 = scmp.ne.s32.totalorder %s19, %s22
    %p31 = scmp.eq.s32.totalorder %s14, 1
    %p32 = por %p30, %p31
    %p33 = scmp.ne.s32.totalorder %s22, %s23
    %p34 = scmp.eq.s32.totalorder %s14, 0
    %p35 = por %p33, %p34
    %p36 = scmp.ne.s32.totalorder %s22, %s23
    %p37 = scmp.eq.s32.totalorder %s15, 1
    %p38 = por %p36, %p37
    %p40 = scmp.ne.s32.totalorder %s23, %s39
    %p41 = scmp.eq.s32.totalorder %s15, 0
    %p42 = por %p40, %p41
    %s44 = sadd.s32 %s43, 1
    %p47 = scmp.eq.s32.totalorder %s9, 1
    %p48 = scmp.ne.s32.totalorder %s43, %s45
    %p49 = scmp.eq.s32.totalorder %s9, 0
    %p50 = por %p48, %p49
    %p51 = scmp.ne.s32.totalorder %s43, %s45
    %p52 = scmp.eq.s32.totalorder %s14, 1
    %p53 = por %p51, %p52
    %p54 = scmp.ne.s32.totalorder %s45, %s46
    %p55 = scmp.eq.s32.totalorder %s14, 0
    %p56 = por %p54, %p55
    %p57 = scmp.ne.s32.totalorder %s45, %s46
    %p58 = scmp.eq.s32.totalorder %s15, 1
    %p59 = por %p57, %p58
    %p61 = scmp.ne.s32.totalorder %s46, %s60
    %p62 = scmp.eq.s32.totalorder %s15, 0
    %p63 = por %p61, %p62
    %s65 = sadd.s32 %s64, 1
    %p68 = scmp.eq.s32.totalorder %s9, 1
    %p69 = scmp.ne.s32.totalorder %s64, %s66
    %p70 = scmp.eq.s32.totalorder %s9, 0
    %p71 = por %p69, %p70
    %p72 = scmp.ne.s32.totalorder %s64, %s66
    %p73 = scmp.eq.s32.totalorder %s14, 1
    %p74 = por %p72, %p73
    %p75 = scmp.ne.s32.totalorder %s66, %s67
    %p76 = scmp.eq.s32.totalorder %s14, 0
    %p77 = por %p75, %p76
    %p78 = scmp.ne.s32.totalorder %s66, %s67
    %p79 = scmp.eq.s32.totalorder %s15, 1
    %p80 = por %p78, %p79
    %p82 = scmp.ne.s32.totalorder %s67, %s81
    %p83 = scmp.eq.s32.totalorder %s15, 0
    %p84 = por %p82, %p83
    %s85 = ssub.s32 %s9, %s16
    %p86 = scmp.eq.s32.totalorder %s85, 0
    %s88 = sadd.s32 %s87, 1
    %s89 = scalar_select %p86, %s87, %s88
    %p92 = pneg %p86
    %p93 = scmp.eq.s32.totalorder %s9, 1
    %p94 = por %p92, %p93
    %p95 = scmp.ne.s32.totalorder %s87, %s90
    %p96 = scmp.eq.s32.totalorder %s9, 0
    %p97 = por %p95, %p96
    %p98 = scmp.ne.s32.totalorder %s87, %s90
    %p99 = scmp.eq.s32.totalorder %s14, 1
    %p100 = por %p98, %p99
    %p101 = scmp.ne.s32.totalorder %s90, %s91
    %p102 = scmp.eq.s32.totalorder %s14, 0
    %p103 = por %p101, %p102
    %p104 = scmp.ne.s32.totalorder %s90, %s91
    %p105 = scmp.eq.s32.totalorder %s15, 1
    %p106 = por %p104, %p105
    %p108 = scmp.ne.s32.totalorder %s91, %s107
    %p109 = scmp.eq.s32.totalorder %s15, 0
    %p110 = por %p108, %p109
    %p111 = scmp.le.s32.totalorder 1, %s9
    %p112 = scmp.lt.s32.totalorder %s9, 3
    %p113 = pnand %p111, %p112
    %p114 = pneg %p113
    // Predicated region
    $region9: #{conv_block_forward.3} parent=5 // pred_check
      _
    $region10: #{conv_block_forward.3} parent=5 // pred_check_branch
      %116 = sbr.rel (%p113) target = $region12
    $region11: #{conv_block_forward.3} parent=5 // pred_region
      %s117 = ssub.s32 %s9, 1
      // Predicated region
      $region13: #{conv_block_forward.3} parent=11 // pred_check
        %p118 = pneg %p56
      $region14: #{conv_block_forward.3} parent=11 // pred_check_branch
        %120 = sbr.rel (%p118) target = $region16
      $region15: #{conv_block_forward.3} parent=11 // pred_region
        _
      $region16: #{conv_block_forward.3} parent=11 // pred_fallthru
        _
      // Predicated region
      $region17: #{conv_block_forward.3} parent=11 // pred_check
        %p121 = pneg %p77
      $region18: #{conv_block_forward.3} parent=11 // pred_check_branch
        %123 = sbr.rel (%p121) target = $region20
      $region19: #{conv_block_forward.3} parent=11 // pred_region
        _
      $region20: #{conv_block_forward.3} parent=11 // pred_fallthru
        _
    $region12: #{conv_block_forward.3} parent=5 // pred_fallthru
      _
    %p124 = scmp.lt.s32.totalorder %s9, 2
    // Predicated region
    $region21: #{conv_block_forward.3} parent=5 // pred_check
      %p125 = pneg %p124
    $region22: #{conv_block_forward.3} parent=5 // pred_check_branch
      %127 = sbr.rel (%p125) target = $region24
    $region23: #{conv_block_forward.3} parent=5 // pred_region
      // Predicated region
      $region25: #{conv_block_forward.3} parent=23 // pred_check
        %p128 = pneg %p29
      $region26: #{conv_block_forward.3} parent=23 // pred_check_branch
        %130 = sbr.rel (%p128) target = $region28
      $region27: #{conv_block_forward.3} parent=23 // pred_region
        %s131 = smul.u32 2, %s9
        %p132 = scmp.lt.s32.totalorder %s131, 3
        %s133 = scalar_select %p132, %s131, 3
        %s134 = smul.addr %s133, 8
        %s135 = scalar_lea.vmem %s0, %s134
        %s136 = smul.u32 2, %s9
      $region28: #{conv_block_forward.3} parent=23 // pred_fallthru
        _
    $region24: #{conv_block_forward.3} parent=5 // pred_fallthru
      _
    %p137 = scmp.le.s32.totalorder 1, %s9
    %p138 = scmp.lt.s32.totalorder %s9, 3
    %p139 = pnand %p137, %p138
    %p140 = pneg %p139
    // Predicated region
    $region29: #{conv_block_forward.3} parent=5 // pred_check
      _
    $region30: #{conv_block_forward.3} parent=5 // pred_check_branch
      %142 = sbr.rel (%p139) target = $region32
    $region31: #{conv_block_forward.3} parent=5 // pred_region
      %s143 = ssub.s32 %s9, 1
      %s144 = smul.u32 2, %s14
      %p145 = scmp.lt.s32.totalorder %s144, 3
      %s146 = scalar_select %p145, %s144, 3
      %s147 = smul.addr %s146, 8
      %s148 = scalar_lea.vmem %s0, %s147
      %p149 = pneg %p35
      %p150 = pneg %p32
      %p151 = pneg %p56
      %p152 = pneg %p53
      %p153 = pneg %p77
      %p154 = pneg %p74
      %p155 = pneg %p103
      %p156 = pneg %p100
      %s157 = smul.u32 2, %s14
      %p158 = scmp.lt.s32.totalorder %s157, 3
      %s159 = scalar_select %p158, %s157, 3
      %s160 = smul.addr %s159, 8
      %s161 = scalar_lea.vmem %s3, %s160
      %s162 = smul.u32 2, %s14
      %p163 = scmp.lt.s32.totalorder %s162, 3
      %s164 = scalar_select %p163, %s162, 3
      %s165 = smul.addr %s164, 8
      %s166 = scalar_lea.vmem %s0, %s165
      %s167 = smul.u32 2, %s14
      %s168 = smul.u32 2, %s14
      %p169 = scmp.lt.s32.totalorder %s168, 3
      %s170 = scalar_select %p169, %s168, 3
      %s171 = smul.addr %s170, 8
      %s172 = scalar_lea.vmem %s3, %s171
      %s173 = smul.u32 2, %s14
      %v174 = vld [vmem:[%s166] sm:$0xff]
      %v175 = vld [vmem:[%s166 + $0x8] sm:$0xff]
      %v176 = vld [vmem:[%s1] sm:$0xff]
      %178 = vset.pattern.permute.xlu0 0
      %179 = vperm.xlu0 %178, %v176
      %v180 = vpop.permute.xlu0 %179
      %v182 = vmul.f32 %v174, %v180
      %v183 = vmul.f32 %v175, %v180
      %v184 = vld [vmem:[%s2] sm:$0xff]
      %186 = vset.pattern.permute.xlu0 0
      %187 = vperm.xlu0 %186, %v184
      %v188 = vpop.permute.xlu0 %187
      %v190 = vadd.f32 %v182, %v188
      %v191 = vadd.f32 %v183, %v188
      %192 = vst [vmem:[%s172] sm:$0xff] %v190
      %193 = vst [vmem:[%s172 + $0x8] sm:$0xff] %v191
      %s194 = smul.u32 2, %s14
      %p195 = scmp.lt.s32.totalorder %s194, 3
      %s196 = scalar_select %p195, %s194, 3
      %s197 = smul.addr %s196, 8
      %s198 = scalar_lea.vmem %s3, %s197
      // Predicated region
      $region33: #{conv_block_forward.3} parent=31 // pred_check
        %p199 = pneg %p100
      $region34: #{conv_block_forward.3} parent=31 // pred_check_branch
        %201 = sbr.rel (%p199) target = $region36
      $region35: #{conv_block_forward.3} parent=31 // pred_region
        %s202 = smul.u32 2, %s14
      $region36: #{conv_block_forward.3} parent=31 // pred_fallthru
        _
    $region32: #{conv_block_forward.3} parent=5 // pred_fallthru
      _
    %p203 = scmp.le.s32.totalorder 2, %s9
    // Predicated region
    $region37: #{conv_block_forward.3} parent=5 // pred_check
      %p204 = pneg %p203
    $region38: #{conv_block_forward.3} parent=5 // pred_check_branch
      %206 = sbr.rel (%p204) target = $region40
    $region39: #{conv_block_forward.3} parent=5 // pred_region
      %s207 = ssub.s32 %s9, 2
      // Predicated region
      $region41: #{conv_block_forward.3} parent=39 // pred_check
        %p208 = pneg %p106
      $region42: #{conv_block_forward.3} parent=39 // pred_check_branch
        %210 = sbr.rel (%p208) target = $region44
      $region43: #{conv_block_forward.3} parent=39 // pred_region
        %s211 = smul.u32 2, %s15
        %p212 = scmp.lt.s32.totalorder %s211, 3
        %s213 = scalar_select %p212, %s211, 3
        %s214 = smul.addr %s213, 8
        %s215 = scalar_lea.vmem %s3, %s214
      $region44: #{conv_block_forward.3} parent=39 // pred_fallthru
        _
    $region40: #{conv_block_forward.3} parent=5 // pred_fallthru
      _
  $region6: #{conv_block_forward.3} parent=0 // loop_footer
    %s13 = sadd.s32 1, %s9
  $region7: #{conv_block_forward.3} parent=0 // loop_footer_branch
    %8 = sbr.rel target = $region3
  $region8: #{conv_block_forward.3} parent=0 // loop_exit
    _

// kernel: conv_block_forward.2
$region0: #{conv_block_forward.2}
  #allocation0 [shape = 'u32[]', space=smem, size = 0x4, offset = 0x4, fixed_abs, tag = 'smem constant byte address 0x4 - core index']
  #allocation1 [shape = 'u32[72,128]{1,0:T(1,128)}', space=vmem, size = 0x9000, scoped, tag = 'internal scratch']
  %s0 = inlined_call_operand.vmem [shape: bf16[512,36], index: 0, kind: input, shape index: {}]
  %s1 = inlined_call_operand.vmem [shape: bf16[36,128], index: 1, kind: input, shape index: {}]
  %s2 = inlined_call_operand.vmem [shape: f32[1,128], index: 2, kind: input, shape index: {}]
  %s3 = inlined_call_operand.vmem [shape: f32[8,512], index: 3, kind: output, shape index: {0}]
  %s4 = inlined_call_operand.vmem [shape: f32[8,128], index: 4, kind: output, shape index: {1}]
  %5 = xla_tuple %s3, %s4
  %s6 = sld [smem:[#allocation0]]
  $region57: #{conv_block_forward.2} parent=0
    _
  %s8 = ssub.s32 1, %s6
  %s9 = scalar_select 0, %s8, %s6
  loop: start=0, step=1, limit=4
  $region2: #{conv_block_forward.2} parent=0 // loop_pre_header
    _
  $region3: #{conv_block_forward.2} parent=0 // loop_header
    %s11 = sphi 0, %s15
    %p12 = scmp.ge.s32.totalorder %s11, 4
    %s21 = sphi 0, %s23
    %s24 = sphi 0, %s21
    %s25 = sphi 0, %s24
    %s41 = sphi 0, %s25
    %s45 = sphi 0, %s45
    %s47 = sphi 0, %s45
    %s48 = sphi 0, %s47
    %s62 = sphi 0, %s48
    %s66 = sphi 0, %s66
    %s68 = sphi 0, %s66
    %s69 = sphi 0, %s68
    %s83 = sphi 0, %s69
    %s89 = sphi 0, %s91
    %s92 = sphi 0, %s89
    %s93 = sphi 0, %s92
    %s109 = sphi 0, %s93
    %s113 = sphi 0, %s113
    %s115 = sphi 0, %s113
    %s116 = sphi 0, %s115
    %s130 = sphi 0, %s116
  $region4: #{conv_block_forward.2} parent=0 // loop_header_branch
    %14 = sbr.rel (%p12) target = $region8
  $region5: #{conv_block_forward.2} parent=0 // loop_body
    %s16 = ssub.s32 %s11, 1
    %s17 = ssub.s32 %s11, 2
    %s18 = sadd.s32 %s11, 1
    %s19 = ssub.s32 %s11, %s18
    %p20 = scmp.eq.s32.totalorder %s19, 0
    %s22 = sadd.s32 %s21, 1
    %s23 = scalar_select %p20, %s21, %s22
    %p26 = pneg %p20
    %p27 = scmp.eq.s32.totalorder %s11, 1
    %p28 = por %p26, %p27
    %p29 = scmp.ne.s32.totalorder %s21, %s24
    %p30 = scmp.eq.s32.totalorder %s11, 0
    %p31 = por %p29, %p30
    %p32 = scmp.ne.s32.totalorder %s21, %s24
    %p33 = scmp.eq.s32.totalorder %s16, 1
    %p34 = por %p32, %p33
    %p35 = scmp.ne.s32.totalorder %s24, %s25
    %p36 = scmp.eq.s32.totalorder %s16, 0
    %p37 = por %p35, %p36
    %p38 = scmp.ne.s32.totalorder %s24, %s25
    %p39 = scmp.eq.s32.totalorder %s17, 1
    %p40 = por %p38, %p39
    %p42 = scmp.ne.s32.totalorder %s25, %s41
    %p43 = scmp.eq.s32.totalorder %s17, 0
    %p44 = por %p42, %p43
    %s46 = sadd.s32 %s45, 1
    %p49 = scmp.eq.s32.totalorder %s11, 1
    %p50 = scmp.ne.s32.totalorder %s45, %s47
    %p51 = scmp.eq.s32.totalorder %s11, 0
    %p52 = por %p50, %p51
    %p53 = scmp.ne.s32.totalorder %s45, %s47
    %p54 = scmp.eq.s32.totalorder %s16, 1
    %p55 = por %p53, %p54
    %p56 = scmp.ne.s32.totalorder %s47, %s48
    %p57 = scmp.eq.s32.totalorder %s16, 0
    %p58 = por %p56, %p57
    %p59 = scmp.ne.s32.totalorder %s47, %s48
    %p60 = scmp.eq.s32.totalorder %s17, 1
    %p61 = por %p59, %p60
    %p63 = scmp.ne.s32.totalorder %s48, %s62
    %p64 = scmp.eq.s32.totalorder %s17, 0
    %p65 = por %p63, %p64
    %s67 = sadd.s32 %s66, 1
    %p70 = scmp.eq.s32.totalorder %s11, 1
    %p71 = scmp.ne.s32.totalorder %s66, %s68
    %p72 = scmp.eq.s32.totalorder %s11, 0
    %p73 = por %p71, %p72
    %p74 = scmp.ne.s32.totalorder %s66, %s68
    %p75 = scmp.eq.s32.totalorder %s16, 1
    %p76 = por %p74, %p75
    %p77 = scmp.ne.s32.totalorder %s68, %s69
    %p78 = scmp.eq.s32.totalorder %s16, 0
    %p79 = por %p77, %p78
    %p80 = scmp.ne.s32.totalorder %s68, %s69
    %p81 = scmp.eq.s32.totalorder %s17, 1
    %p82 = por %p80, %p81
    %p84 = scmp.ne.s32.totalorder %s69, %s83
    %p85 = scmp.eq.s32.totalorder %s17, 0
    %p86 = por %p84, %p85
    %s87 = ssub.s32 %s11, %s18
    %p88 = scmp.eq.s32.totalorder %s87, 0
    %s90 = sadd.s32 %s89, 1
    %s91 = scalar_select %p88, %s89, %s90
    %p94 = pneg %p88
    %p95 = scmp.eq.s32.totalorder %s11, 1
    %p96 = por %p94, %p95
    %p97 = scmp.ne.s32.totalorder %s89, %s92
    %p98 = scmp.eq.s32.totalorder %s11, 0
    %p99 = por %p97, %p98
    %p100 = scmp.ne.s32.totalorder %s89, %s92
    %p101 = scmp.eq.s32.totalorder %s16, 1
    %p102 = por %p100, %p101
    %p103 = scmp.ne.s32.totalorder %s92, %s93
    %p104 = scmp.eq.s32.totalorder %s16, 0
    %p105 = por %p103, %p104
    %p106 = scmp.ne.s32.totalorder %s92, %s93
    %p107 = scmp.eq.s32.totalorder %s17, 1
    %p108 = por %p106, %p107
    %p110 = scmp.ne.s32.totalorder %s93, %s109
    %p111 = scmp.eq.s32.totalorder %s17, 0
    %p112 = por %p110, %p111
    %s114 = sadd.s32 %s113, 1
    %p117 = scmp.eq.s32.totalorder %s11, 1
    %p118 = scmp.ne.s32.totalorder %s113, %s115
    %p119 = scmp.eq.s32.totalorder %s11, 0
    %p120 = por %p118, %p119
    %p121 = scmp.ne.s32.totalorder %s113, %s115
    %p122 = scmp.eq.s32.totalorder %s16, 1
    %p123 = por %p121, %p122
    %p124 = scmp.ne.s32.totalorder %s115, %s116
    %p125 = scmp.eq.s32.totalorder %s16, 0
    %p126 = por %p124, %p125
    %p127 = scmp.ne.s32.totalorder %s115, %s116
    %p128 = scmp.eq.s32.totalorder %s17, 1
    %p129 = por %p127, %p128
    %p131 = scmp.ne.s32.totalorder %s116, %s130
    %p132 = scmp.eq.s32.totalorder %s17, 0
    %p133 = por %p131, %p132
    %p134 = scmp.le.s32.totalorder 1, %s11
    %p135 = scmp.lt.s32.totalorder %s11, 3
    %p136 = pnand %p134, %p135
    %p137 = pneg %p136
    // Predicated region
    $region9: #{conv_block_forward.2} parent=5 // pred_check
      _
    $region10: #{conv_block_forward.2} parent=5 // pred_check_branch
      %139 = sbr.rel (%p136) target = $region12
    $region11: #{conv_block_forward.2} parent=5 // pred_region
      %s140 = ssub.s32 %s11, 1
      // Predicated region
      $region13: #{conv_block_forward.2} parent=11 // pred_check
        %p141 = pneg %p58
      $region14: #{conv_block_forward.2} parent=11 // pred_check_branch
        %143 = sbr.rel (%p141) target = $region16
      $region15: #{conv_block_forward.2} parent=11 // pred_region
        _
      $region16: #{conv_block_forward.2} parent=11 // pred_fallthru
        _
      // Predicated region
      $region17: #{conv_block_forward.2} parent=11 // pred_check
        %p144 = pneg %p79
      $region18: #{conv_block_forward.2} parent=11 // pred_check_branch
        %146 = sbr.rel (%p144) target = $region20
      $region19: #{conv_block_forward.2} parent=11 // pred_region
        _
      $region20: #{conv_block_forward.2} parent=11 // pred_fallthru
        _
    $region12: #{conv_block_forward.2} parent=5 // pred_fallthru
      _
    %p147 = scmp.lt.s32.totalorder %s11, 2
    // Predicated region
    $region21: #{conv_block_forward.2} parent=5 // pred_check
      %p148 = pneg %p147
    $region22: #{conv_block_forward.2} parent=5 // pred_check_branch
      %150 = sbr.rel (%p148) target = $region24
    $region23: #{conv_block_forward.2} parent=5 // pred_region
      // Predicated region
      $region25: #{conv_block_forward.2} parent=23 // pred_check
        %p151 = pneg %p31
      $region26: #{conv_block_forward.2} parent=23 // pred_check_branch
        %153 = sbr.rel (%p151) target = $region28
      $region27: #{conv_block_forward.2} parent=23 // pred_region
        %s154 = smul.u32 32, %s11
        %p155 = scmp.lt.s32.totalorder %s154, 63
        %s156 = scalar_select %p155, %s154, 63
        %s157 = smul.addr %s156, 4
        %s158 = scalar_lea.vmem %s0, %s157
        %s159 = smul.u32 32, %s11
      $region28: #{conv_block_forward.2} parent=23 // pred_fallthru
        _
    $region24: #{conv_block_forward.2} parent=5 // pred_fallthru
      _
    %p160 = scmp.le.s32.totalorder 1, %s11
    %p161 = scmp.lt.s32.totalorder %s11, 3
    %p162 = pnand %p160, %p161
    %p163 = pneg %p162
    // Predicated region
    $region29: #{conv_block_forward.2} parent=5 // pred_check
      _
    $region30: #{conv_block_forward.2} parent=5 // pred_check_branch
      %165 = sbr.rel (%p162) target = $region32
    $region31: #{conv_block_forward.2} parent=5 // pred_region
      %s166 = ssub.s32 %s11, 1
      %s167 = smul.u32 32, %s16
      %p168 = scmp.lt.s32.totalorder %s167, 63
      %s169 = scalar_select %p168, %s167, 63
      %s170 = smul.addr %s169, 4
      %s171 = scalar_lea.vmem %s0, %s170
      %p172 = pneg %p37
      %p173 = pneg %p34
      %p174 = pneg %p58
      %p175 = pneg %p55
      %p176 = pneg %p79
      %p177 = pneg %p76
      %p178 = pneg %p105
      %p179 = pneg %p102
      %s180 = smul.u32 2, %s16
      %p181 = scmp.lt.s32.totalorder %s180, 3
      %s182 = scalar_select %p181, %s180, 3
      %s183 = smul.addr %s182, 8
      %s184 = scalar_lea.vmem %s3, %s183
      %p185 = pneg %p126
      %p186 = pneg %p123
      %s187 = smul.u32 32, %s16
      %p188 = scmp.lt.s32.totalorder %s187, 63
      %s189 = scalar_select %p188, %s187, 63
      %s190 = smul.addr %s189, 4
      %s191 = scalar_lea.vmem %s0, %s190
      %s192 = smul.u32 32, %s16
      %s193 = smul.u32 2, %s16
      %p194 = scmp.lt.s32.totalorder %s193, 3
      %s195 = scalar_select %p194, %s193, 3
      %s196 = smul.addr %s195, 8
      %s197 = scalar_lea.vmem %s3, %s196
      %s198 = smul.u32 2, %s16
      %p200 = scmp.eq.s32.totalorder %s16, 0
      // Predicated region
      $region33: #{conv_block_forward.2} parent=31 // pred_check
        %p201 = pneg %p200
      $region34: #{conv_block_forward.2} parent=31 // pred_check_branch
        %203 = sbr.rel (%p201) target = $region36
      $region35: #{conv_block_forward.2} parent=31 // pred_region
        %204 = vst [vmem:[%s4] sm:$0xff] 0.0
      $region36: #{conv_block_forward.2} parent=31 // pred_fallthru
        _
      %v205 = vld [vmem:[%s191] sm:$0xf]
      %v206 = vld [vmem:[%s191 + $0x4] sm:$0xf]
      %v207 = vld [vmem:[%s191 + $0x8] sm:$0xf]
      %v208 = vld [vmem:[%s191 + $0xc] sm:$0xf]
      %v209 = vld [vmem:[%s191 + $0x10] sm:$0xf]
      %v210 = vld [vmem:[%s191 + $0x14] sm:$0xf]
      %v211 = vld [vmem:[%s191 + $0x18] sm:$0xf]
      %v212 = vld [vmem:[%s191 + $0x1c] sm:$0xf]
      %v213 = vld [vmem:[%s191 + $0x20] sm:$0xf]
      %v214 = vld [vmem:[%s191 + $0x24] sm:$0xf]
      %v215 = vld [vmem:[%s191 + $0x28] sm:$0xf]
      %v216 = vld [vmem:[%s191 + $0x2c] sm:$0xf]
      %v217 = vld [vmem:[%s191 + $0x30] sm:$0xf]
      %v218 = vld [vmem:[%s191 + $0x34] sm:$0xf]
      %v219 = vld [vmem:[%s191 + $0x38] sm:$0xf]
      %v220 = vld [vmem:[%s191 + $0x3c] sm:$0xf]
      %v221 = vld [vmem:[%s191 + $0x40] sm:$0xf]
      %v222 = vld [vmem:[%s191 + $0x44] sm:$0xf]
      %v223 = vld [vmem:[%s191 + $0x48] sm:$0xf]
      %v224 = vld [vmem:[%s191 + $0x4c] sm:$0xf]
      %v225 = vld [vmem:[%s191 + $0x50] sm:$0xf]
      %v226 = vld [vmem:[%s191 + $0x54] sm:$0xf]
      %v227 = vld [vmem:[%s191 + $0x58] sm:$0xf]
      %v228 = vld [vmem:[%s191 + $0x5c] sm:$0xf]
      %v229 = vld [vmem:[%s191 + $0x60] sm:$0xf]
      %v230 = vld [vmem:[%s191 + $0x64] sm:$0xf]
      %v231 = vld [vmem:[%s191 + $0x68] sm:$0xf]
      %v232 = vld [vmem:[%s191 + $0x6c] sm:$0xf]
      %v233 = vld [vmem:[%s191 + $0x70] sm:$0xf]
      %v234 = vld [vmem:[%s191 + $0x74] sm:$0xf]
      %v235 = vld [vmem:[%s191 + $0x78] sm:$0xf]
      %v236 = vld [vmem:[%s191 + $0x7c] sm:$0xf]
      %v237 = vld [vmem:[%s1] sm:$0xf]
      %v238 = vld [vmem:[%s1 + $0x4] sm:$0xf]
      %v239 = vld [vmem:[%s1 + $0x8] sm:$0xf]
      %v240 = vld [vmem:[%s1 + $0xc] sm:$0xf]
      %v241 = vld [vmem:[%s1 + $0x10] sm:$0x3]
      %v242 = vld [vmem:[%s2] sm:$0x1]
      %v244 = vperm.slane %v242, 0
      %v278 = vunpack.c.l.b16 %v205
      %v279 = vunpack.c.l.b16 %v206
      %v280 = vunpack.c.l.b16 %v207
      %v281 = vunpack.c.l.b16 %v208
      %v282 = vunpack.c.l.b16 %v209
      %v283 = vunpack.c.l.b16 %v210
      %v284 = vunpack.c.l.b16 %v211
      %v285 = vunpack.c.l.b16 %v212
      %v286 = vunpack.c.l.b16 %v213
      %v287 = vunpack.c.l.b16 %v214
      %v288 = vunpack.c.l.b16 %v215
      %v289 = vunpack.c.l.b16 %v216
      %v290 = vunpack.c.l.b16 %v217
      %v291 = vunpack.c.l.b16 %v218
      %v292 = vunpack.c.l.b16 %v219
      %v293 = vunpack.c.l.b16 %v220
      %v294 = vunpack.c.l.b16 %v221
      %v295 = vunpack.c.l.b16 %v222
      %v296 = vunpack.c.l.b16 %v223
      %v297 = vunpack.c.l.b16 %v224
      %v298 = vunpack.c.l.b16 %v225
      %v299 = vunpack.c.l.b16 %v226
      %v300 = vunpack.c.l.b16 %v227
      %v301 = vunpack.c.l.b16 %v228
      %v302 = vunpack.c.l.b16 %v229
      %v303 = vunpack.c.l.b16 %v230
      %v304 = vunpack.c.l.b16 %v231
      %v305 = vunpack.c.l.b16 %v232
      %v306 = vunpack.c.l.b16 %v233
      %v307 = vunpack.c.l.b16 %v234
      %v308 = vunpack.c.l.b16 %v235
      %v309 = vunpack.c.l.b16 %v236
      %v310 = vpack.c.b16 %v279, %v278
      %v311 = vpack.c.b16 %v281, %v280
      %v312 = vpack.c.b16 %v283, %v282
      %v313 = vpack.c.b16 %v285, %v284
      %v314 = vpack.c.b16 %v287, %v286
      %v315 = vpack.c.b16 %v289, %v288
      %v316 = vpack.c.b16 %v291, %v290
      %v317 = vpack.c.b16 %v293, %v292
      %v318 = vpack.c.b16 %v295, %v294
      %v319 = vpack.c.b16 %v297, %v296
      %v320 = vpack.c.b16 %v299, %v298
      %v321 = vpack.c.b16 %v301, %v300
      %v322 = vpack.c.b16 %v303, %v302
      %v323 = vpack.c.b16 %v305, %v304
      %v324 = vpack.c.b16 %v307, %v306
      %v325 = vpack.c.b16 %v309, %v308
      %v331 = vunpack.c.l.b16 %v237
      %v332 = vunpack.c.l.b16 %v238
      %v333 = vunpack.c.l.b16 %v239
      %v334 = vunpack.c.l.b16 %v240
      %v335 = vunpack.c.l.b16 %v241
      %v336 = vpack.c.b16 %v332, %v331
      %v337 = vpack.c.b16 %v334, %v333
      %v338 = vpack.c.b16 %v335, %v335
      %vm341 = vcmask 293888
      %v343 = vsel %vm341, %v310, 0
      %v346 = vsel %vm341, %v311, 0
      %v349 = vsel %vm341, %v312, 0
      %v352 = vsel %vm341, %v313, 0
      %v355 = vsel %vm341, %v314, 0
      %v358 = vsel %vm341, %v315, 0
      %v361 = vsel %vm341, %v316, 0
      %v364 = vsel %vm341, %v317, 0
      %v367 = vsel %vm341, %v318, 0
      %v370 = vsel %vm341, %v319, 0
      %v373 = vsel %vm341, %v320, 0
      %v376 = vsel %vm341, %v321, 0
      %v379 = vsel %vm341, %v322, 0
      %v382 = vsel %vm341, %v323, 0
      %v385 = vsel %vm341, %v324, 0
      %v388 = vsel %vm341, %v325, 0
      %vm390 = vcmask 1041408
      %v392 = vsel %vm390, %v338, 0
      %394 = vmatpush.bf16.msra.mxu0 0
      %395 = vmatpush.bf16.msra.mxu0 0
      %396 = vmatpush.bf16.msra.mxu0 0
      %397 = vmatpush.bf16.msra.mxu0 0
      %398 = vmatpush.bf16.msra.mxu0 0
      %399 = vmatpush.bf16.msra.mxu0 %v392
      %400 = vmatpush.bf16.msra.mxu0 %v337
      %401 = vmatpush.bf16.msra.mxu0 %v336
      %402 = vmatmul.bf16.gmra.mxu0 %v343
      %v403 = vpop.f32.mrf.mxu0
      %v404 = vadd.f32 %v244, %v403
      %v405 = vpop.f32.mrf.mxu0
      %v406 = vadd.f32 %v244, %v405
      %407 = vmatmul.bf16.gmra.mxu0 %v346
      %v408 = vpop.f32.mrf.mxu0
      %v409 = vadd.f32 %v244, %v408
      %v410 = vpop.f32.mrf.mxu0
      %v411 = vadd.f32 %v244, %v410
      %412 = vmatmul.bf16.gmra.mxu0 %v349
      %v413 = vpop.f32.mrf.mxu0
      %v414 = vadd.f32 %v244, %v413
      %v415 = vpop.f32.mrf.mxu0
      %v416 = vadd.f32 %v244, %v415
      %417 = vmatmul.bf16.gmra.mxu0 %v352
      %v418 = vpop.f32.mrf.mxu0
      %v419 = vadd.f32 %v244, %v418
      %v420 = vpop.f32.mrf.mxu0
      %v421 = vadd.f32 %v244, %v420
      %422 = vmatmul.bf16.gmra.mxu0 %v355
      %v423 = vpop.f32.mrf.mxu0
      %v424 = vadd.f32 %v244, %v423
      %v425 = vpop.f32.mrf.mxu0
      %v426 = vadd.f32 %v244, %v425
      %427 = vmatmul.bf16.gmra.mxu0 %v358
      %v428 = vpop.f32.mrf.mxu0
      %v429 = vadd.f32 %v244, %v428
      %v430 = vpop.f32.mrf.mxu0
      %v431 = vadd.f32 %v244, %v430
      %432 = vmatmul.bf16.gmra.mxu0 %v361
      %v433 = vpop.f32.mrf.mxu0
      %v434 = vadd.f32 %v244, %v433
      %v435 = vpop.f32.mrf.mxu0
      %v436 = vadd.f32 %v244, %v435
      %437 = vmatmul.bf16.gmra.mxu0 %v364
      %v438 = vpop.f32.mrf.mxu0
      %v439 = vadd.f32 %v244, %v438
      %v440 = vpop.f32.mrf.mxu0
      %v441 = vadd.f32 %v244, %v440
      %442 = vmatmul.bf16.gmra.mxu0 %v367
      %v443 = vpop.f32.mrf.mxu0
      %v444 = vadd.f32 %v244, %v443
      %v445 = vpop.f32.mrf.mxu0
      %v446 = vadd.f32 %v244, %v445
      %447 = vmatmul.bf16.gmra.mxu0 %v370
      %v448 = vpop.f32.mrf.mxu0
      %v449 = vadd.f32 %v244, %v448
      %v450 = vpop.f32.mrf.mxu0
      %v451 = vadd.f32 %v244, %v450
      %452 = vmatmul.bf16.gmra.mxu0 %v373
      %v453 = vpop.f32.mrf.mxu0
      %v454 = vadd.f32 %v244, %v453
      %v455 = vpop.f32.mrf.mxu0
      %v456 = vadd.f32 %v244, %v455
      %457 = vmatmul.bf16.gmra.mxu0 %v376
      %v458 = vpop.f32.mrf.mxu0
      %v459 = vadd.f32 %v244, %v458
      %v460 = vpop.f32.mrf.mxu0
      %v461 = vadd.f32 %v244, %v460
      %462 = vmatmul.bf16.gmra.mxu0 %v379
      %v463 = vpop.f32.mrf.mxu0
      %v464 = vadd.f32 %v244, %v463
      %v465 = vpop.f32.mrf.mxu0
      %v466 = vadd.f32 %v244, %v465
      %467 = vmatmul.bf16.gmra.mxu0 %v382
      %v468 = vpop.f32.mrf.mxu0
      %v469 = vadd.f32 %v244, %v468
      %v470 = vpop.f32.mrf.mxu0
      %v471 = vadd.f32 %v244, %v470
      %472 = vmatmul.bf16.gmra.mxu0 %v385
      %v473 = vpop.f32.mrf.mxu0
      %v474 = vadd.f32 %v244, %v473
      %v475 = vpop.f32.mrf.mxu0
      %v476 = vadd.f32 %v244, %v475
      %477 = vmatmul.bf16.gmra.mxu0 %v388
      %v478 = vpop.f32.mrf.mxu0
      %v479 = vadd.f32 %v244, %v478
      %v480 = vpop.f32.mrf.mxu0
      %v481 = vadd.f32 %v244, %v480
      %482 = vdwg.mxu0
      %vm483 = vcmp.ge.f32.partialorder %v404, 0.0
      %vm484 = vcmp.ge.f32.partialorder %v406, 0.0
      %vm485 = vcmp.ge.f32.partialorder %v409, 0.0
      %vm486 = vcmp.ge.f32.partialorder %v411, 0.0
      %vm487 = vcmp.ge.f32.partialorder %v414, 0.0
      %vm488 = vcmp.ge.f32.partialorder %v416, 0.0
      %vm489 = vcmp.ge.f32.partialorder %v419, 0.0
      %vm490 = vcmp.ge.f32.partialorder %v421, 0.0
      %vm491 = vcmp.ge.f32.partialorder %v424, 0.0
      %vm492 = vcmp.ge.f32.partialorder %v426, 0.0
      %vm493 = vcmp.ge.f32.partialorder %v429, 0.0
      %vm494 = vcmp.ge.f32.partialorder %v431, 0.0
      %vm495 = vcmp.ge.f32.partialorder %v434, 0.0
      %vm496 = vcmp.ge.f32.partialorder %v436, 0.0
      %vm497 = vcmp.ge.f32.partialorder %v439, 0.0
      %vm498 = vcmp.ge.f32.partialorder %v441, 0.0
      %vm499 = vcmp.ge.f32.partialorder %v444, 0.0
      %vm500 = vcmp.ge.f32.partialorder %v446, 0.0
      %vm501 = vcmp.ge.f32.partialorder %v449, 0.0
      %vm502 = vcmp.ge.f32.partialorder %v451, 0.0
      %vm503 = vcmp.ge.f32.partialorder %v454, 0.0
      %vm504 = vcmp.ge.f32.partialorder %v456, 0.0
      %vm505 = vcmp.ge.f32.partialorder %v459, 0.0
      %vm506 = vcmp.ge.f32.partialorder %v461, 0.0
      %vm507 = vcmp.ge.f32.partialorder %v464, 0.0
      %vm508 = vcmp.ge.f32.partialorder %v466, 0.0
      %vm509 = vcmp.ge.f32.partialorder %v469, 0.0
      %vm510 = vcmp.ge.f32.partialorder %v471, 0.0
      %vm511 = vcmp.ge.f32.partialorder %v474, 0.0
      %vm512 = vcmp.ge.f32.partialorder %v476, 0.0
      %vm513 = vcmp.ge.f32.partialorder %v479, 0.0
      %vm514 = vcmp.ge.f32.partialorder %v481, 0.0
      %v515 = vmul.f32 %v404, 0.01
      %v516 = vmul.f32 %v406, 0.01
      %v517 = vmul.f32 %v409, 0.01
      %v518 = vmul.f32 %v411, 0.01
      %v519 = vmul.f32 %v414, 0.01
      %v520 = vmul.f32 %v416, 0.01
      %v521 = vmul.f32 %v419, 0.01
      %v522 = vmul.f32 %v421, 0.01
      %v523 = vmul.f32 %v424, 0.01
      %v524 = vmul.f32 %v426, 0.01
      %v525 = vmul.f32 %v429, 0.01
      %v526 = vmul.f32 %v431, 0.01
      %v527 = vmul.f32 %v434, 0.01
      %v528 = vmul.f32 %v436, 0.01
      %v529 = vmul.f32 %v439, 0.01
      %v530 = vmul.f32 %v441, 0.01
      %v531 = vmul.f32 %v444, 0.01
      %v532 = vmul.f32 %v446, 0.01
      %v533 = vmul.f32 %v449, 0.01
      %v534 = vmul.f32 %v451, 0.01
      %v535 = vmul.f32 %v454, 0.01
      %v536 = vmul.f32 %v456, 0.01
      %v537 = vmul.f32 %v459, 0.01
      %v538 = vmul.f32 %v461, 0.01
      %v539 = vmul.f32 %v464, 0.01
      %v540 = vmul.f32 %v466, 0.01
      %v541 = vmul.f32 %v469, 0.01
      %v542 = vmul.f32 %v471, 0.01
      %v543 = vmul.f32 %v474, 0.01
      %v544 = vmul.f32 %v476, 0.01
      %v545 = vmul.f32 %v479, 0.01
      %v546 = vmul.f32 %v481, 0.01
      %v547 = vsel %vm483, %v404, %v515
      %v548 = vsel %vm484, %v406, %v516
      %v549 = vsel %vm485, %v409, %v517
      %v550 = vsel %vm486, %v411, %v518
      %v551 = vsel %vm487, %v414, %v519
      %v552 = vsel %vm488, %v416, %v520
      %v553 = vsel %vm489, %v419, %v521
      %v554 = vsel %vm490, %v421, %v522
      %v555 = vsel %vm491, %v424, %v523
      %v556 = vsel %vm492, %v426, %v524
      %v557 = vsel %vm493, %v429, %v525
      %v558 = vsel %vm494, %v431, %v526
      %v559 = vsel %vm495, %v434, %v527
      %v560 = vsel %vm496, %v436, %v528
      %v561 = vsel %vm497, %v439, %v529
      %v562 = vsel %vm498, %v441, %v530
      %v563 = vsel %vm499, %v444, %v531
      %v564 = vsel %vm500, %v446, %v532
      %v565 = vsel %vm501, %v449, %v533
      %v566 = vsel %vm502, %v451, %v534
      %v567 = vsel %vm503, %v454, %v535
      %v568 = vsel %vm504, %v456, %v536
      %v569 = vsel %vm505, %v459, %v537
      %v570 = vsel %vm506, %v461, %v538
      %v571 = vsel %vm507, %v464, %v539
      %v572 = vsel %vm508, %v466, %v540
      %v573 = vsel %vm509, %v469, %v541
      %v574 = vsel %vm510, %v471, %v542
      %v575 = vsel %vm511, %v474, %v543
      %v576 = vsel %vm512, %v476, %v544
      %v577 = vsel %vm513, %v479, %v545
      %v578 = vsel %vm514, %v481, %v546
      %v579 = vlaneseq
      %v580 = vshrl.u32 %v579, 7
      %v581 = vadd.s32 %v580, 8
      %v582 = vadd.s32 %v580, 16
      %v583 = vadd.s32 %v580, 24
      %v584 = vadd.s32 %v580, 32
      %v585 = vadd.s32 %v580, 40
      %v586 = vadd.s32 %v580, 48
      %v587 = vadd.s32 %v580, 56
      %v588 = vadd.s32 %v580, 64
      %v589 = vadd.s32 %v580, 72
      %v590 = vadd.s32 %v580, 80
      %v591 = vadd.s32 %v580, 88
      %v592 = vadd.s32 %v580, 96
      %v593 = vadd.s32 %v580, 104
      %v594 = vadd.s32 %v580, 112
      %v595 = vadd.s32 %v580, 120
      %v596 = vadd.s32 %v580, 128
      %v597 = vadd.s32 %v580, 136
      %v598 = vadd.s32 %v580, 144
      %v599 = vadd.s32 %v580, 152
      %v600 = vadd.s32 %v580, 160
      %v601 = vadd.s32 %v580, 168
      %v602 = vadd.s32 %v580, 176
      %v603 = vadd.s32 %v580, 184
      %v604 = vadd.s32 %v580, 192
      %v605 = vadd.s32 %v580, 200
      %v606 = vadd.s32 %v580, 208
      %v607 = vadd.s32 %v580, 216
      %v608 = vadd.s32 %v580, 224
      %v609 = vadd.s32 %v580, 232
      %v610 = vadd.s32 %v580, 240
      %v611 = vadd.s32 %v580, 248
      %s612 = smul.u32 %s16, 256
      %v613 = vstv %s612
      %v614 = vadd.s32 %v580, %v613
      %v615 = vadd.s32 %v581, %v613
      %v616 = vadd.s32 %v582, %v613
      %v617 = vadd.s32 %v583, %v613
      %v618 = vadd.s32 %v584, %v613
      %v619 = vadd.s32 %v585, %v613
      %v620 = vadd.s32 %v586, %v613
      %v621 = vadd.s32 %v587, %v613
      %v622 = vadd.s32 %v588, %v613
      %v623 = vadd.s32 %v589, %v613
      %v624 = vadd.s32 %v590, %v613
      %v625 = vadd.s32 %v591, %v613
      %v626 = vadd.s32 %v592, %v613
      %v627 = vadd.s32 %v593, %v613
      %v628 = vadd.s32 %v594, %v613
      %v629 = vadd.s32 %v595, %v613
      %v630 = vadd.s32 %v596, %v613
      %v631 = vadd.s32 %v597, %v613
      %v632 = vadd.s32 %v598, %v613
      %v633 = vadd.s32 %v599, %v613
      %v634 = vadd.s32 %v600, %v613
      %v635 = vadd.s32 %v601, %v613
      %v636 = vadd.s32 %v602, %v613
      %v637 = vadd.s32 %v603, %v613
      %v638 = vadd.s32 %v604, %v613
      %v639 = vadd.s32 %v605, %v613
      %v640 = vadd.s32 %v606, %v613
      %v641 = vadd.s32 %v607, %v613
      %v642 = vadd.s32 %v608, %v613
      %v643 = vadd.s32 %v609, %v613
      %v644 = vadd.s32 %v610, %v613
      %v645 = vadd.s32 %v611, %v613
      %vm646 = vcmp.lt.s32.totalorder %v614, 512
      %vm647 = vcmp.lt.s32.totalorder %v615, 512
      %vm648 = vcmp.lt.s32.totalorder %v616, 512
      %vm649 = vcmp.lt.s32.totalorder %v617, 512
      %vm650 = vcmp.lt.s32.totalorder %v618, 512
      %vm651 = vcmp.lt.s32.totalorder %v619, 512
      %vm652 = vcmp.lt.s32.totalorder %v620, 512
      %vm653 = vcmp.lt.s32.totalorder %v621, 512
      %vm654 = vcmp.lt.s32.totalorder %v622, 512
      %vm655 = vcmp.lt.s32.totalorder %v623, 512
      %vm656 = vcmp.lt.s32.totalorder %v624, 512
      %vm657 = vcmp.lt.s32.totalorder %v625, 512
      %vm658 = vcmp.lt.s32.totalorder %v626, 512
      %vm659 = vcmp.lt.s32.totalorder %v627, 512
      %vm660 = vcmp.lt.s32.totalorder %v628, 512
      %vm661 = vcmp.lt.s32.totalorder %v629, 512
      %vm662 = vcmp.lt.s32.totalorder %v630, 512
      %vm663 = vcmp.lt.s32.totalorder %v631, 512
      %vm664 = vcmp.lt.s32.totalorder %v632, 512
      %vm665 = vcmp.lt.s32.totalorder %v633, 512
      %vm666 = vcmp.lt.s32.totalorder %v634, 512
      %vm667 = vcmp.lt.s32.totalorder %v635, 512
      %vm668 = vcmp.lt.s32.totalorder %v636, 512
      %vm669 = vcmp.lt.s32.totalorder %v637, 512
      %vm670 = vcmp.lt.s32.totalorder %v638, 512
      %vm671 = vcmp.lt.s32.totalorder %v639, 512
      %vm672 = vcmp.lt.s32.totalorder %v640, 512
      %vm673 = vcmp.lt.s32.totalorder %v641, 512
      %vm674 = vcmp.lt.s32.totalorder %v642, 512
      %vm675 = vcmp.lt.s32.totalorder %v643, 512
      %vm676 = vcmp.lt.s32.totalorder %v644, 512
      %vm677 = vcmp.lt.s32.totalorder %v645, 512
      %v678 = vsel %vm646, 1, 0
      %v679 = vsel %vm647, 1, 0
      %v680 = vsel %vm648, 1, 0
      %v681 = vsel %vm649, 1, 0
      %v682 = vsel %vm650, 1, 0
      %v683 = vsel %vm651, 1, 0
      %v684 = vsel %vm652, 1, 0
      %v685 = vsel %vm653, 1, 0
      %v686 = vsel %vm654, 1, 0
      %v687 = vsel %vm655, 1, 0
      %v688 = vsel %vm656, 1, 0
      %v689 = vsel %vm657, 1, 0
      %v690 = vsel %vm658, 1, 0
      %v691 = vsel %vm659, 1, 0
      %v692 = vsel %vm660, 1, 0
      %v693 = vsel %vm661, 1, 0
      %v694 = vsel %vm662, 1, 0
      %v695 = vsel %vm663, 1, 0
      %v696 = vsel %vm664, 1, 0
      %v697 = vsel %vm665, 1, 0
      %v698 = vsel %vm666, 1, 0
      %v699 = vsel %vm667, 1, 0
      %v700 = vsel %vm668, 1, 0
      %v701 = vsel %vm669, 1, 0
      %v702 = vsel %vm670, 1, 0
      %v703 = vsel %vm671, 1, 0
      %v704 = vsel %vm672, 1, 0
      %v705 = vsel %vm673, 1, 0
      %v706 = vsel %vm674, 1, 0
      %v707 = vsel %vm675, 1, 0
      %v708 = vsel %vm676, 1, 0
      %v709 = vsel %vm677, 1, 0
      %v710 = vcvt.s32.f32 %v678
      %v711 = vcvt.s32.f32 %v679
      %v712 = vcvt.s32.f32 %v680
      %v713 = vcvt.s32.f32 %v681
      %v714 = vcvt.s32.f32 %v682
      %v715 = vcvt.s32.f32 %v683
      %v716 = vcvt.s32.f32 %v684
      %v717 = vcvt.s32.f32 %v685
      %v718 = vcvt.s32.f32 %v686
      %v719 = vcvt.s32.f32 %v687
      %v720 = vcvt.s32.f32 %v688
      %v721 = vcvt.s32.f32 %v689
      %v722 = vcvt.s32.f32 %v690
      %v723 = vcvt.s32.f32 %v691
      %v724 = vcvt.s32.f32 %v692
      %v725 = vcvt.s32.f32 %v693
      %v726 = vcvt.s32.f32 %v694
      %v727 = vcvt.s32.f32 %v695
      %v728 = vcvt.s32.f32 %v696
      %v729 = vcvt.s32.f32 %v697
      %v730 = vcvt.s32.f32 %v698
      %v731 = vcvt.s32.f32 %v699
      %v732 = vcvt.s32.f32 %v700
      %v733 = vcvt.s32.f32 %v701
      %v734 = vcvt.s32.f32 %v702
      %v735 = vcvt.s32.f32 %v703
      %v736 = vcvt.s32.f32 %v704
      %v737 = vcvt.s32.f32 %v705
      %v738 = vcvt.s32.f32 %v706
      %v739 = vcvt.s32.f32 %v707
      %v740 = vcvt.s32.f32 %v708
      %v741 = vcvt.s32.f32 %v709
      %v742 = vmul.f32 %v547, %v710
      %v743 = vmul.f32 %v548, %v711
      %v744 = vmul.f32 %v549, %v712
      %v745 = vmul.f32 %v550, %v713
      %v746 = vmul.f32 %v551, %v714
      %v747 = vmul.f32 %v552, %v715
      %v748 = vmul.f32 %v553, %v716
      %v749 = vmul.f32 %v554, %v717
      %v750 = vmul.f32 %v555, %v718
      %v751 = vmul.f32 %v556, %v719
      %v752 = vmul.f32 %v557, %v720
      %v753 = vmul.f32 %v558, %v721
      %v754 = vmul.f32 %v559, %v722
      %v755 = vmul.f32 %v560, %v723
      %v756 = vmul.f32 %v561, %v724
      %v757 = vmul.f32 %v562, %v725
      %v758 = vmul.f32 %v563, %v726
      %v759 = vmul.f32 %v564, %v727
      %v760 = vmul.f32 %v565, %v728
      %v761 = vmul.f32 %v566, %v729
      %v762 = vmul.f32 %v567, %v730
      %v763 = vmul.f32 %v568, %v731
      %v764 = vmul.f32 %v569, %v732
      %v765 = vmul.f32 %v570, %v733
      %v766 = vmul.f32 %v571, %v734
      %v767 = vmul.f32 %v572, %v735
      %v768 = vmul.f32 %v573, %v736
      %v769 = vmul.f32 %v574, %v737
      %v770 = vmul.f32 %v575, %v738
      %v771 = vmul.f32 %v576, %v739
      %v772 = vmul.f32 %v577, %v740
      %v773 = vmul.f32 %v578, %v741
      %v774 = vld [vmem:[%s4] sm:$0x1]
      %v775 = vadd.f32 %v742, %v743
      %v776 = vadd.f32 %v775, %v744
      %v777 = vadd.f32 %v776, %v745
      %v778 = vadd.f32 %v777, %v746
      %v779 = vadd.f32 %v778, %v747
      %v780 = vadd.f32 %v779, %v748
      %v781 = vadd.f32 %v780, %v749
      %v782 = vadd.f32 %v781, %v750
      %v783 = vadd.f32 %v782, %v751
      %v784 = vadd.f32 %v783, %v752
      %v785 = vadd.f32 %v784, %v753
      %v786 = vadd.f32 %v785, %v754
      %v787 = vadd.f32 %v786, %v755
      %v788 = vadd.f32 %v787, %v756
      %v789 = vadd.f32 %v788, %v757
      %v790 = vadd.f32 %v789, %v758
      %v791 = vadd.f32 %v790, %v759
      %v792 = vadd.f32 %v791, %v760
      %v793 = vadd.f32 %v792, %v761
      %v794 = vadd.f32 %v793, %v762
      %v795 = vadd.f32 %v794, %v763
      %v796 = vadd.f32 %v795, %v764
      %v797 = vadd.f32 %v796, %v765
      %v798 = vadd.f32 %v797, %v766
      %v799 = vadd.f32 %v798, %v767
      %v800 = vadd.f32 %v799, %v768
      %v801 = vadd.f32 %v800, %v769
      %v802 = vadd.f32 %v801, %v770
      %v803 = vadd.f32 %v802, %v771
      %v804 = vadd.f32 %v803, %v772
      %v805 = vadd.f32 %v804, %v773
      %v806 = vrot.slane %v805, 4
      %v807 = vadd.f32 %v805, %v806
      %v808 = vrot.slane %v807, 2
      %v809 = vadd.f32 %v807, %v808
      %v810 = vrot.slane %v809, 1
      %v811 = vadd.f32 %v809, %v810
      %v812 = vadd.f32 %v774, %v811
      %813 = vst [vmem:[%s4] sm:$0x1] %v812
      %v814 = vld [vmem:[%s4 + $0x1] sm:$0x1]
      %v815 = vmul.f32 %v742, %v742
      %v816 = vmul.f32 %v743, %v743
      %v817 = vmul.f32 %v744, %v744
      %v818 = vmul.f32 %v745, %v745
      %v819 = vmul.f32 %v746, %v746
      %v820 = vmul.f32 %v747, %v747
      %v821 = vmul.f32 %v748, %v748
      %v822 = vmul.f32 %v749, %v749
      %v823 = vmul.f32 %v750, %v750
      %v824 = vmul.f32 %v751, %v751
      %v825 = vmul.f32 %v752, %v752
      %v826 = vmul.f32 %v753, %v753
      %v827 = vmul.f32 %v754, %v754
      %v828 = vmul.f32 %v755, %v755
      %v829 = vmul.f32 %v756, %v756
      %v830 = vmul.f32 %v757, %v757
      %v831 = vmul.f32 %v758, %v758
      %v832 = vmul.f32 %v759, %v759
      %v833 = vmul.f32 %v760, %v760
      %v834 = vmul.f32 %v761, %v761
      %v835 = vmul.f32 %v762, %v762
      %v836 = vmul.f32 %v763, %v763
      %v837 = vmul.f32 %v764, %v764
      %v838 = vmul.f32 %v765, %v765
      %v839 = vmul.f32 %v766, %v766
      %v840 = vmul.f32 %v767, %v767
      %v841 = vmul.f32 %v768, %v768
      %v842 = vmul.f32 %v769, %v769
      %v843 = vmul.f32 %v770, %v770
      %v844 = vmul.f32 %v771, %v771
      %v845 = vmul.f32 %v772, %v772
      %v846 = vmul.f32 %v773, %v773
      %v847 = vadd.f32 %v815, %v816
      %v848 = vadd.f32 %v847, %v817
      %v849 = vadd.f32 %v848, %v818
      %v850 = vadd.f32 %v849, %v819
      %v851 = vadd.f32 %v850, %v820
      %v852 = vadd.f32 %v851, %v821
      %v853 = vadd.f32 %v852, %v822
      %v854 = vadd.f32 %v853, %v823
      %v855 = vadd.f32 %v854, %v824
      %v856 = vadd.f32 %v855, %v825
      %v857 = vadd.f32 %v856, %v826
      %v858 = vadd.f32 %v857, %v827
      %v859 = vadd.f32 %v858, %v828
      %v860 = vadd.f32 %v859, %v829
      %v861 = vadd.f32 %v860, %v830
      %v862 = vadd.f32 %v861, %v831
      %v863 = vadd.f32 %v862, %v832
      %v864 = vadd.f32 %v863, %v833
      %v865 = vadd.f32 %v864, %v834
      %v866 = vadd.f32 %v865, %v835
      %v867 = vadd.f32 %v866, %v836
      %v868 = vadd.f32 %v867, %v837
      %v869 = vadd.f32 %v868, %v838
      %v870 = vadd.f32 %v869, %v839
      %v871 = vadd.f32 %v870, %v840
      %v872 = vadd.f32 %v871, %v841
      %v873 = vadd.f32 %v872, %v842
      %v874 = vadd.f32 %v873, %v843
      %v875 = vadd.f32 %v874, %v844
      %v876 = vadd.f32 %v875, %v845
      %v877 = vadd.f32 %v876, %v846
      %v878 = vrot.slane %v877, 4
      %v879 = vadd.f32 %v877, %v878
      %v880 = vrot.slane %v879, 2
      %v881 = vadd.f32 %v879, %v880
      %v882 = vrot.slane %v881, 1
      %v883 = vadd.f32 %v881, %v882
      %v884 = vadd.f32 %v814, %v883
      %885 = vst [vmem:[%s4 + $0x1] sm:$0x1] %v884
      %886 = vxpose.xlu0.b32.start [1/16] %v547, 128
      %887 = vxpose.xlu0.b32.cont [2/16] %v548, 128
      %888 = vxpose.xlu0.b32.cont [3/16] %v549, 128
      %889 = vxpose.xlu0.b32.cont [4/16] %v550, 128
      %890 = vxpose.xlu0.b32.cont [5/16] %v551, 128
      %891 = vxpose.xlu0.b32.cont [6/16] %v552, 128
      %892 = vxpose.xlu0.b32.cont [7/16] %v553, 128
      %893 = vxpose.xlu0.b32.cont [8/16] %v554, 128
      %894 = vxpose.xlu0.b32.cont [9/16] %v555, 128
      %895 = vxpose.xlu0.b32.cont [10/16] %v556, 128
      %896 = vxpose.xlu0.b32.cont [11/16] %v557, 128
      %897 = vxpose.xlu0.b32.cont [12/16] %v558, 128
      %898 = vxpose.xlu0.b32.cont [13/16] %v559, 128
      %899 = vxpose.xlu0.b32.cont [14/16] %v560, 128
      %900 = vxpose.xlu0.b32.cont [15/16] %v561, 128
      %901 = vxpose.xlu0.b32.end [16/16] %v562, 128
      %v902 = vpop.trf.xlu0
      %v903 = vpop.trf.xlu0
      %v904 = vpop.trf.xlu0
      %v905 = vpop.trf.xlu0
      %v906 = vpop.trf.xlu0
      %v907 = vpop.trf.xlu0
      %v908 = vpop.trf.xlu0
      %v909 = vpop.trf.xlu0
      %v910 = vpop.trf.xlu0
      %v911 = vpop.trf.xlu0
      %v912 = vpop.trf.xlu0
      %v913 = vpop.trf.xlu0
      %v914 = vpop.trf.xlu0
      %v915 = vpop.trf.xlu0
      %v916 = vpop.trf.xlu0
      %v917 = vpop.trf.xlu0
      %918 = vxpose.xlu0.b32.start [1/16] %v563, 128
      %919 = vxpose.xlu0.b32.cont [2/16] %v564, 128
      %920 = vxpose.xlu0.b32.cont [3/16] %v565, 128
      %921 = vxpose.xlu0.b32.cont [4/16] %v566, 128
      %922 = vxpose.xlu0.b32.cont [5/16] %v567, 128
      %923 = vxpose.xlu0.b32.cont [6/16] %v568, 128
      %924 = vxpose.xlu0.b32.cont [7/16] %v569, 128
      %925 = vxpose.xlu0.b32.cont [8/16] %v570, 128
      %926 = vxpose.xlu0.b32.cont [9/16] %v571, 128
      %927 = vxpose.xlu0.b32.cont [10/16] %v572, 128
      %928 = vxpose.xlu0.b32.cont [11/16] %v573, 128
      %929 = vxpose.xlu0.b32.cont [12/16] %v574, 128
      %930 = vxpose.xlu0.b32.cont [13/16] %v575, 128
      %931 = vxpose.xlu0.b32.cont [14/16] %v576, 128
      %932 = vxpose.xlu0.b32.cont [15/16] %v577, 128
      %933 = vxpose.xlu0.b32.end [16/16] %v578, 128
      %v934 = vpop.trf.xlu0
      %v935 = vpop.trf.xlu0
      %v936 = vpop.trf.xlu0
      %v937 = vpop.trf.xlu0
      %v938 = vpop.trf.xlu0
      %v939 = vpop.trf.xlu0
      %v940 = vpop.trf.xlu0
      %v941 = vpop.trf.xlu0
      %v942 = vpop.trf.xlu0
      %v943 = vpop.trf.xlu0
      %v944 = vpop.trf.xlu0
      %v945 = vpop.trf.xlu0
      %v946 = vpop.trf.xlu0
      %v947 = vpop.trf.xlu0
      %v948 = vpop.trf.xlu0
      %v949 = vpop.trf.xlu0
      %950 = vst [vmem:[%s197] sm:$0xff] %v902
      %951 = vst [vmem:[%s197 + $0x8] sm:$0xff] %v934
      %s952 = smul.u32 2, %s16
      %p953 = scmp.lt.s32.totalorder %s952, 3
      %s954 = scalar_select %p953, %s952, 3
      %s955 = smul.addr %s954, 8
      %s956 = scalar_lea.vmem %s3, %s955
      // Predicated region
      $region37: #{conv_block_forward.2} parent=31 // pred_check
        %p957 = pneg %p102
      $region38: #{conv_block_forward.2} parent=31 // pred_check_branch
        %959 = sbr.rel (%p957) target = $region40
      $region39: #{conv_block_forward.2} parent=31 // pred_region
        %s960 = smul.u32 2, %s16
      $region40: #{conv_block_forward.2} parent=31 // pred_fallthru
        _
      // Predicated region
      $region41: #{conv_block_forward.2} parent=31 // pred_check
        %p961 = pneg %p123
      $region42: #{conv_block_forward.2} parent=31 // pred_check_branch
        %963 = sbr.rel (%p961) target = $region44
      $region43: #{conv_block_forward.2} parent=31 // pred_region
        _
      $region44: #{conv_block_forward.2} parent=31 // pred_fallthru
        _
      // Predicated region
      $region45: #{conv_block_forward.2} parent=31 // pred_check
        %p964 = pneg %p123
      $region46: #{conv_block_forward.2} parent=31 // pred_check_branch
        %966 = sbr.rel (%p964) target = $region48
      $region47: #{conv_block_forward.2} parent=31 // pred_region
        _
      $region48: #{conv_block_forward.2} parent=31 // pred_fallthru
        _
    $region32: #{conv_block_forward.2} parent=5 // pred_fallthru
      _
    %p967 = scmp.le.s32.totalorder 2, %s11
    // Predicated region
    $region49: #{conv_block_forward.2} parent=5 // pred_check
      %p968 = pneg %p967
    $region50: #{conv_block_forward.2} parent=5 // pred_check_branch
      %970 = sbr.rel (%p968) target = $region52
    $region51: #{conv_block_forward.2} parent=5 // pred_region
      %s971 = ssub.s32 %s11, 2
      // Predicated region
      $region53: #{conv_block_forward.2} parent=51 // pred_check
        %p972 = pneg %p108
      $region54: #{conv_block_forward.2} parent=51 // pred_check_branch
        %974 = sbr.rel (%p972) target = $region56
      $region55: #{conv_block_forward.2} parent=51 // pred_region
        %s975 = smul.u32 2, %s17
        %p976 = scmp.lt.s32.totalorder %s975, 3
        %s977 = scalar_select %p976, %s975, 3
        %s978 = smul.addr %s977, 8
        %s979 = scalar_lea.vmem %s3, %s978
      $region56: #{conv_block_forward.2} parent=51 // pred_fallthru
        _
    $region52: #{conv_block_forward.2} parent=5 // pred_fallthru
      _
  $region6: #{conv_block_forward.2} parent=0 // loop_footer
    %s15 = sadd.s32 1, %s11
  $region7: #{conv_block_forward.2} parent=0 // loop_footer_branch
    %10 = sbr.rel target = $region3
  $region8: #{conv_block_forward.2} parent=0 // loop_exit
    _

</llo_original>
